<compile_context>
chip_gen: v5e
topology: v5e:2x2
jax: 0.10.0
libtpu: 0.0.40
codegen_flags: <defaults>
</compile_context>

<pallas_src>
import functools

import jax
import jax.numpy as jnp
from jax.experimental import pallas as pl
from jax.experimental.pallas import tpu as pltpu


# --------------------------------------------------------------------------- #
# Helpers
# --------------------------------------------------------------------------- #
def _round_up(a, b):
    return pl.cdiv(a, b) * b


def _vmem_capacity_bytes():
    """Per-chip VMEM capacity (falls back to the v7x-safe 64 MiB)."""
    try:
        info = pltpu.get_tpu_info()
        cap = getattr(info, "vmem_capacity_bytes", None)
        if cap:
            return int(cap)
    except Exception:
        pass
    return 64 * 2**20


def _pick_images_per_step(n, per_image_vmem_bytes, lanes_per_image,
                          vmem_budget=8 * 2**20, max_lanes=4096):
    """Images packed per grid step.

    Amortizes per-step pipeline overhead while keeping the 'parallel' grid
    axis splittable: >= 2 steps, preferably an even count (v7x megacore).
    """
    divs = [d for d in range(1, n + 1)
            if n % d == 0
            and (d == 1 or (d * per_image_vmem_bytes <= vmem_budget
                            and d * lanes_per_image <= max_lanes))]
    for want_even in (True, False):
        for nb in sorted(divs, reverse=True):
            steps = n // nb
            if steps >= 2 and (not want_even or steps % 2 == 0):
                return nb
    return max(divs) if divs else 1


def _pick_tile_m(m_pad):
    """Largest tile dividing m_pad; prefers big, 256-aligned tiles (v6e MXU)."""
    for cand in (4096, 2048, 1024, 512, 256, 128):
        if m_pad % cand == 0:
            return cand
    return m_pad


# --------------------------------------------------------------------------- #
# Fused path (stride == (1, 1)): im2col inside the kernel
# --------------------------------------------------------------------------- #
def _fused_kernel(x_ref, w_ref, b_ref, o_ref, *, kh, kw, wp, m_lanes):
    # x_ref: (NB, C, F)      flattened zero-padded images (+ guard), compute dtype
    # w_ref: (KH*KW, O, C)   per-tap weight slices
    # b_ref: (O, 1)          f32 bias
    # o_ref: (NB, O, m_lanes) with m_lanes = Ho * Wp (padded-width lanes trimmed on host)
    nb = x_ref.shape[0]
    o_ch = w_ref.shape[1]
    for b in range(nb):                       # static unroll over images in this step
        xi = x_ref[b]                         # (C, F) resident in VMEM
        acc = jnp.zeros((o_ch, m_lanes), jnp.float32)
        for i in range(kh):
            for j in range(kw):
                s = i * wp + j                # static shift -> static lane slice
                slab = xi[:, s:s + m_lanes]   # (C, m_lanes)
                acc = acc + jnp.dot(w_ref[i * kw + j], slab,
                                    preferred_element_type=jnp.float32)
        acc = acc + b_ref[...]                # f32 bias, broadcast along lanes
        o_ref[b] = jnp.tanh(acc).astype(o_ref.dtype)   # lane-dense store


def _conv_tanh_fused(x, weight, bias, kernel_size, padding, compute_dtype):
    out_dtype = x.dtype
    n, c, h, w = x.shape
    o_ch = weight.shape[0]
    kh, kw = kernel_size
    ph, pw = padding
    hp, wp = h + 2 * ph, w + 2 * pw
    ho, wo = hp - kh + 1, wp - kw + 1          # stride (1, 1)
    m_lanes = ho * wp                          # lane axis per image (incl. padded cols)
    max_shift = (kh - 1) * wp + (kw - 1)
    f_len = int(_round_up(m_lanes + max_shift, 128))   # guard so shifted slices stay in-bounds

    # Host side: only cast + pad + flatten of x itself (no 9x patch expansion,
    # no transposes).  Padded-column lanes compute garbage and are trimmed.
    xc = x.astype(compute_dtype)
    xp = jnp.pad(xc, ((0, 0), (0, 0), (ph, ph), (pw, pw)))
    xf = xp.reshape(n, c, hp * wp)
    xf = jnp.pad(xf, ((0, 0), (0, 0), (0, f_len - hp * wp)))

    wt = weight.transpose(2, 3, 0, 1).reshape(kh * kw, o_ch, c).astype(compute_dtype)
    b2d = bias.reshape(o_ch, 1).astype(jnp.float32)

    csz = jnp.dtype(compute_dtype).itemsize
    osz = jnp.dtype(out_dtype).itemsize
    per_image = 2 * c * f_len * csz + 2 * o_ch * m_lanes * osz   # double-buffered in/out
    nb = _pick_images_per_step(n, per_image, m_lanes)
    grid = (n // nb,)

    # Weight/bias are grid-invariant: counted once (not double-buffered).
    est_vmem = nb * per_image + kh * kw * o_ch * c * csz + o_ch * 4
    vmem_cap = _vmem_capacity_bytes()
    vmem_limit = int(min(int(0.75 * vmem_cap), max(32 * 2**20, 2 * est_vmem)))

    kernel = functools.partial(_fused_kernel, kh=kh, kw=kw, wp=wp, m_lanes=m_lanes)
    out = pl.pallas_call(
        kernel,
        out_shape=jax.ShapeDtypeStruct((n, o_ch, m_lanes), out_dtype),
        grid=grid,
        in_specs=[
            pl.BlockSpec((nb, c, f_len), lambda b: (b, 0, 0)),        # image slab(s)
            pl.BlockSpec((kh * kw, o_ch, c), lambda b: (0, 0, 0)),    # weight (invariant)
            pl.BlockSpec((o_ch, 1), lambda b: (0, 0)),                # bias   (invariant)
        ],
        out_specs=pl.BlockSpec((nb, o_ch, m_lanes), lambda b: (b, 0, 0)),
        compiler_params=pltpu.CompilerParams(
            dimension_semantics=("parallel",),
            vmem_limit_bytes=vmem_limit),
    )(xf, wt, b2d)

    # Free reshape + tiny width trim (no transpose pass).
    out = out.reshape(n, o_ch, ho, wp)[:, :, :, :wo]
    return out


# --------------------------------------------------------------------------- #
# Fallback path (stride != (1, 1)): host im2col in [N, K, M] + single-dot GEMM
# --------------------------------------------------------------------------- #
def _patches_kernel(w_ref, p_ref, b_ref, o_ref):
    # w_ref: (O, K)  p_ref: (1, K, tm)  b_ref: (O, 1)  o_ref: (1, O, tm)
    acc = jnp.dot(w_ref[...], p_ref[0], preferred_element_type=jnp.float32)
    o_ref[0] = jnp.tanh(acc + b_ref[...]).astype(o_ref.dtype)


def _conv_tanh_patches(x, weight, bias, kernel_size, stride, padding, compute_dtype):
    out_dtype = x.dtype
    n, c, h, w = x.shape
    o_ch = weight.shape[0]
    kh, kw = kernel_size
    sh, sw = stride
    ph, pw = padding
    ho = (h + 2 * ph - kh) // sh + 1
    wo = (w + 2 * pw - kw) // sw + 1
    k = c * kh * kw
    m = ho * wo

    xc = x.astype(compute_dtype)
    xp = jnp.pad(xc, ((0, 0), (0, 0), (ph, ph), (pw, pw)))
    cols = [xp[:, :, i:i + sh * ho:sh, j:j + sw * wo:sw]
            for i in range(kh) for j in range(kw)]
    patches = jnp.stack(cols, axis=2).reshape(n, k, m)      # [N, K, M], K = (C, KH, KW)

    m_pad = int(_round_up(m, 128))
    if m_pad != m:
        patches = jnp.pad(patches, ((0, 0), (0, 0), (0, m_pad - m)))
    tm = _pick_tile_m(m_pad)

    w2d = weight.reshape(o_ch, k).astype(compute_dtype)
    b2d = bias.reshape(o_ch, 1).astype(jnp.float32)

    csz = jnp.dtype(compute_dtype).itemsize
    osz = jnp.dtype(out_dtype).itemsize
    est_vmem = 2 * k * tm * csz + 2 * o_ch * tm * osz + o_ch * k * csz + o_ch * 4
    vmem_cap = _vmem_capacity_bytes()
    vmem_limit = int(min(int(0.75 * vmem_cap), max(32 * 2**20, 2 * est_vmem)))

    out = pl.pallas_call(
        _patches_kernel,
        out_shape=jax.ShapeDtypeStruct((n, o_ch, m_pad), out_dtype),
        grid=(n, m_pad // tm),
        in_specs=[
            pl.BlockSpec((o_ch, k), lambda b, i: (0, 0)),        # weight (invariant)
            pl.BlockSpec((1, k, tm), lambda b, i: (b, 0, i)),    # patches tile
            pl.BlockSpec((o_ch, 1), lambda b, i: (0, 0)),        # bias (invariant)
        ],
        out_specs=pl.BlockSpec((1, o_ch, tm), lambda b, i: (b, 0, i)),
        compiler_params=pltpu.CompilerParams(
            dimension_semantics=("parallel", "parallel"),
            vmem_limit_bytes=vmem_limit),
    )(w2d, patches, b2d)

    out = out[:, :, :m].reshape(n, o_ch, ho, wo)
    return out


# --------------------------------------------------------------------------- #
# Public entry point (matches Conv2dTanh2.forward)
# --------------------------------------------------------------------------- #
@functools.partial(
    jax.jit, static_argnames=("kernel_size", "stride", "padding", "compute_dtype"))
def conv2d_tanh2(x, weight, bias, *, kernel_size, stride=(1, 1), padding=(0, 0),
                 compute_dtype=jnp.bfloat16):
    """Pallas implementation of Conv2dTanh2.forward.

    x:      [N, C, H, W]
    weight: [O, C, KH, KW]   (PyTorch Conv2d layout)
    bias:   [O]
    returns [N, O, Ho, Wo]   (dtype of x)
    """
    kernel_size = tuple(kernel_size)
    stride = tuple(stride)
    padding = tuple(padding)
    if stride == (1, 1):
        return _conv_tanh_fused(x, weight, bias, kernel_size, padding, compute_dtype)
    return _conv_tanh_patches(x, weight, bias, kernel_size, stride, padding,
                              compute_dtype)


# --------------------------------------------------------------------------- #
# Self-test
# --------------------------------------------------------------------------- #
if __name__ == "__main__":
    # Module config: Conv2dTanh2(4, 8, (3,3), stride=(1,1), padding=(1,1), bias=True)
    N, C, H, W = 2, 4, 16, 16
    O, KH, KW = 8, 3, 3

    key = jax.random.PRNGKey(0)
    kx, kw_, kb = jax.random.split(key, 3)
    x = jax.random.normal(kx, (N, C, H, W), dtype=jnp.float32)
    fan_in = C * KH * KW
    bound = 1.0 / (fan_in ** 0.5)
    weight = jax.random.uniform(kw_, (O, C, KH, KW), jnp.float32, -bound, bound)
    bias = jax.random.uniform(kb, (O,), jnp.float32, -bound, bound)

    def ref_conv_tanh(xi, wi, bi, stride, padding):
        r = jax.lax.conv_general_dilated(
            xi, wi, window_strides=stride,
            padding=[(padding[0], padding[0]), (padding[1], padding[1])],
            dimension_numbers=("NCHW", "OIHW", "NCHW"))
        return jnp.tanh(r + bi[None, :, None, None])

    # --- Primary (fused) path: stride (1,1), padding (1,1), bf16 compute.
    out_bf16 = conv2d_tanh2(x, weight, bias, kernel_size=(KH, KW),
                            stride=(1, 1), padding=(1, 1),
                            compute_dtype=jnp.bfloat16)
    out_bf16 = jax.block_until_ready(out_bf16)
    ref = ref_conv_tanh(x, weight, bias, (1, 1), (1, 1))
    assert out_bf16.shape == (N, O, H, W)
    assert out_bf16.dtype == x.dtype
    assert jnp.allclose(out_bf16, ref, atol=5e-2, rtol=5e-2)

    # --- Tight numerical cross-check of the fused kernel structure (f32).
    out_f32 = conv2d_tanh2(x, weight, bias, kernel_size=(KH, KW),
                           stride=(1, 1), padding=(1, 1),
                           compute_dtype=jnp.float32)
    out_f32 = jax.block_until_ready(out_f32)
    assert jnp.allclose(out_f32, ref, atol=1e-4, rtol=1e-4)

    # --- Strided config exercises the [N,K,M] im2col + GEMM fallback path.
    out_s2 = conv2d_tanh2(x, weight, bias, kernel_size=(KH, KW),
                          stride=(2, 2), padding=(1, 1),
                          compute_dtype=jnp.float32)
    out_s2 = jax.block_until_ready(out_s2)
    ref_s2 = ref_conv_tanh(x, weight, bias, (2, 2), (1, 1))
    assert out_s2.shape == ref_s2.shape
    assert jnp.allclose(out_s2, ref_s2, atol=1e-4, rtol=1e-4)

    print("KERNEL_OK")
</pallas_src>

<mosaic_0001>
module attributes {stable_mosaic.version = 11 : i64} {
  func.func @_fused_kernel(%arg0: i32, %arg1: memref<1x4x384xbf16, #tpu.memory_space<vmem>>, %arg2: memref<9x8x4xbf16, #tpu.memory_space<vmem>>, %arg3: memref<8x1xf32, #tpu.memory_space<vmem>>, %arg4: memref<1x8x288xf32, #tpu.memory_space<vmem>>) attributes {dimension_semantics = [#tpu.dimension_semantics<parallel>], iteration_bounds = array<i64: 2>, scalar_prefetch = 0 : i64, scratch_operands = 0 : i64, tpu.core_type = #tpu.core_type<tc>, window_params = [{transform_indices = @transform_0, window_bounds = array<i64: 1, 4, 384>}, {pipeline_mode = #tpu.pipeline_mode<synchronous>, transform_indices = @transform_1, window_bounds = array<i64: 9, 8, 4>}, {pipeline_mode = #tpu.pipeline_mode<synchronous>, transform_indices = @transform_2, window_bounds = array<i64: 8, 1>}, {transform_indices = @transform_3, window_bounds = array<i64: 1, 8, 288>}]} {
    %c0 = arith.constant 0 : index
    %c0_0 = arith.constant 0 : index
    %c0_1 = arith.constant 0 : index
    %0 = vector.load %arg1[%c0, %c0_0, %c0_1] : memref<1x4x384xbf16, #tpu.memory_space<vmem>>, vector<1x4x384xbf16>
    %1 = vector.shape_cast %0 : vector<1x4x384xbf16> to vector<4x384xbf16>
    %cst = arith.constant 0.000000e+00 : f32
    %2 = vector.broadcast %cst : f32 to vector<8x288xf32>
    %3 = vector.extract_strided_slice %1 {offsets = [0, 0], sizes = [4, 288], strides = [1, 1]} : vector<4x384xbf16> to vector<4x288xbf16>
    %c0_2 = arith.constant 0 : index
    %c0_3 = arith.constant 0 : index
    %c0_4 = arith.constant 0 : index
    %4 = vector.load %arg2[%c0_2, %c0_3, %c0_4] : memref<9x8x4xbf16, #tpu.memory_space<vmem>>, vector<1x8x4xbf16>
    %5 = vector.shape_cast %4 : vector<1x8x4xbf16> to vector<8x4xbf16>
    %cst_5 = arith.constant dense<0.000000e+00> : vector<8x288xf32>
    %6 = tpu.matmul %5, %3, %cst_5 {dimension_numbers = #tpu.dot_dimension_numbers<[1], [0], [0], [1], [0, 0, 1, 1], [], []>} : vector<8x4xbf16>, vector<4x288xbf16>, vector<8x288xf32> -> vector<8x288xf32>
    %7 = arith.addf %2, %6 : vector<8x288xf32>
    %8 = vector.extract_strided_slice %1 {offsets = [0, 1], sizes = [4, 288], strides = [1, 1]} : vector<4x384xbf16> to vector<4x288xbf16>
    %c1 = arith.constant 1 : index
    %c0_6 = arith.constant 0 : index
    %c0_7 = arith.constant 0 : index
    %9 = vector.load %arg2[%c1, %c0_6, %c0_7] : memref<9x8x4xbf16, #tpu.memory_space<vmem>>, vector<1x8x4xbf16>
    %10 = vector.shape_cast %9 : vector<1x8x4xbf16> to vector<8x4xbf16>
    %cst_8 = arith.constant dense<0.000000e+00> : vector<8x288xf32>
    %11 = tpu.matmul %10, %8, %cst_8 {dimension_numbers = #tpu.dot_dimension_numbers<[1], [0], [0], [1], [0, 0, 1, 1], [], []>} : vector<8x4xbf16>, vector<4x288xbf16>, vector<8x288xf32> -> vector<8x288xf32>
    %12 = arith.addf %7, %11 : vector<8x288xf32>
    %13 = vector.extract_strided_slice %1 {offsets = [0, 2], sizes = [4, 288], strides = [1, 1]} : vector<4x384xbf16> to vector<4x288xbf16>
    %c2 = arith.constant 2 : index
    %c0_9 = arith.constant 0 : index
    %c0_10 = arith.constant 0 : index
    %14 = vector.load %arg2[%c2, %c0_9, %c0_10] : memref<9x8x4xbf16, #tpu.memory_space<vmem>>, vector<1x8x4xbf16>
    %15 = vector.shape_cast %14 : vector<1x8x4xbf16> to vector<8x4xbf16>
    %cst_11 = arith.constant dense<0.000000e+00> : vector<8x288xf32>
    %16 = tpu.matmul %15, %13, %cst_11 {dimension_numbers = #tpu.dot_dimension_numbers<[1], [0], [0], [1], [0, 0, 1, 1], [], []>} : vector<8x4xbf16>, vector<4x288xbf16>, vector<8x288xf32> -> vector<8x288xf32>
    %17 = arith.addf %12, %16 : vector<8x288xf32>
    %18 = vector.extract_strided_slice %1 {offsets = [0, 18], sizes = [4, 288], strides = [1, 1]} : vector<4x384xbf16> to vector<4x288xbf16>
    %c3 = arith.constant 3 : index
    %c0_12 = arith.constant 0 : index
    %c0_13 = arith.constant 0 : index
    %19 = vector.load %arg2[%c3, %c0_12, %c0_13] : memref<9x8x4xbf16, #tpu.memory_space<vmem>>, vector<1x8x4xbf16>
    %20 = vector.shape_cast %19 : vector<1x8x4xbf16> to vector<8x4xbf16>
    %cst_14 = arith.constant dense<0.000000e+00> : vector<8x288xf32>
    %21 = tpu.matmul %20, %18, %cst_14 {dimension_numbers = #tpu.dot_dimension_numbers<[1], [0], [0], [1], [0, 0, 1, 1], [], []>} : vector<8x4xbf16>, vector<4x288xbf16>, vector<8x288xf32> -> vector<8x288xf32>
    %22 = arith.addf %17, %21 : vector<8x288xf32>
    %23 = vector.extract_strided_slice %1 {offsets = [0, 19], sizes = [4, 288], strides = [1, 1]} : vector<4x384xbf16> to vector<4x288xbf16>
    %c4 = arith.constant 4 : index
    %c0_15 = arith.constant 0 : index
    %c0_16 = arith.constant 0 : index
    %24 = vector.load %arg2[%c4, %c0_15, %c0_16] : memref<9x8x4xbf16, #tpu.memory_space<vmem>>, vector<1x8x4xbf16>
    %25 = vector.shape_cast %24 : vector<1x8x4xbf16> to vector<8x4xbf16>
    %cst_17 = arith.constant dense<0.000000e+00> : vector<8x288xf32>
    %26 = tpu.matmul %25, %23, %cst_17 {dimension_numbers = #tpu.dot_dimension_numbers<[1], [0], [0], [1], [0, 0, 1, 1], [], []>} : vector<8x4xbf16>, vector<4x288xbf16>, vector<8x288xf32> -> vector<8x288xf32>
    %27 = arith.addf %22, %26 : vector<8x288xf32>
    %28 = vector.extract_strided_slice %1 {offsets = [0, 20], sizes = [4, 288], strides = [1, 1]} : vector<4x384xbf16> to vector<4x288xbf16>
    %c5 = arith.constant 5 : index
    %c0_18 = arith.constant 0 : index
    %c0_19 = arith.constant 0 : index
    %29 = vector.load %arg2[%c5, %c0_18, %c0_19] : memref<9x8x4xbf16, #tpu.memory_space<vmem>>, vector<1x8x4xbf16>
    %30 = vector.shape_cast %29 : vector<1x8x4xbf16> to vector<8x4xbf16>
    %cst_20 = arith.constant dense<0.000000e+00> : vector<8x288xf32>
    %31 = tpu.matmul %30, %28, %cst_20 {dimension_numbers = #tpu.dot_dimension_numbers<[1], [0], [0], [1], [0, 0, 1, 1], [], []>} : vector<8x4xbf16>, vector<4x288xbf16>, vector<8x288xf32> -> vector<8x288xf32>
    %32 = arith.addf %27, %31 : vector<8x288xf32>
    %33 = vector.extract_strided_slice %1 {offsets = [0, 36], sizes = [4, 288], strides = [1, 1]} : vector<4x384xbf16> to vector<4x288xbf16>
    %c6 = arith.constant 6 : index
    %c0_21 = arith.constant 0 : index
    %c0_22 = arith.constant 0 : index
    %34 = vector.load %arg2[%c6, %c0_21, %c0_22] : memref<9x8x4xbf16, #tpu.memory_space<vmem>>, vector<1x8x4xbf16>
    %35 = vector.shape_cast %34 : vector<1x8x4xbf16> to vector<8x4xbf16>
    %cst_23 = arith.constant dense<0.000000e+00> : vector<8x288xf32>
    %36 = tpu.matmul %35, %33, %cst_23 {dimension_numbers = #tpu.dot_dimension_numbers<[1], [0], [0], [1], [0, 0, 1, 1], [], []>} : vector<8x4xbf16>, vector<4x288xbf16>, vector<8x288xf32> -> vector<8x288xf32>
    %37 = arith.addf %32, %36 : vector<8x288xf32>
    %38 = vector.extract_strided_slice %1 {offsets = [0, 37], sizes = [4, 288], strides = [1, 1]} : vector<4x384xbf16> to vector<4x288xbf16>
    %c7 = arith.constant 7 : index
    %c0_24 = arith.constant 0 : index
    %c0_25 = arith.constant 0 : index
    %39 = vector.load %arg2[%c7, %c0_24, %c0_25] : memref<9x8x4xbf16, #tpu.memory_space<vmem>>, vector<1x8x4xbf16>
    %40 = vector.shape_cast %39 : vector<1x8x4xbf16> to vector<8x4xbf16>
    %cst_26 = arith.constant dense<0.000000e+00> : vector<8x288xf32>
    %41 = tpu.matmul %40, %38, %cst_26 {dimension_numbers = #tpu.dot_dimension_numbers<[1], [0], [0], [1], [0, 0, 1, 1], [], []>} : vector<8x4xbf16>, vector<4x288xbf16>, vector<8x288xf32> -> vector<8x288xf32>
    %42 = arith.addf %37, %41 : vector<8x288xf32>
    %43 = vector.extract_strided_slice %1 {offsets = [0, 38], sizes = [4, 288], strides = [1, 1]} : vector<4x384xbf16> to vector<4x288xbf16>
    %c8 = arith.constant 8 : index
    %c0_27 = arith.constant 0 : index
    %c0_28 = arith.constant 0 : index
    %44 = vector.load %arg2[%c8, %c0_27, %c0_28] : memref<9x8x4xbf16, #tpu.memory_space<vmem>>, vector<1x8x4xbf16>
    %45 = vector.shape_cast %44 : vector<1x8x4xbf16> to vector<8x4xbf16>
    %cst_29 = arith.constant dense<0.000000e+00> : vector<8x288xf32>
    %46 = tpu.matmul %45, %43, %cst_29 {dimension_numbers = #tpu.dot_dimension_numbers<[1], [0], [0], [1], [0, 0, 1, 1], [], []>} : vector<8x4xbf16>, vector<4x288xbf16>, vector<8x288xf32> -> vector<8x288xf32>
    %47 = arith.addf %42, %46 : vector<8x288xf32>
    %c0_30 = arith.constant 0 : index
    %c0_31 = arith.constant 0 : index
    %48 = vector.load %arg3[%c0_30, %c0_31] : memref<8x1xf32, #tpu.memory_space<vmem>>, vector<8x1xf32>
    %49 = vector.broadcast %48 : vector<8x1xf32> to vector<8x288xf32>
    %50 = arith.addf %47, %49 : vector<8x288xf32>
    %51 = math.tanh %50 : vector<8x288xf32>
    %c0_32 = arith.constant 0 : index
    %c0_33 = arith.constant 0 : index
    %c0_34 = arith.constant 0 : index
    %52 = vector.load %arg4[%c0_32, %c0_33, %c0_34] : memref<1x8x288xf32, #tpu.memory_space<vmem>>, vector<1x8x288xf32>
    %53 = vector.shape_cast %52 : vector<1x8x288xf32> to vector<8x288xf32>
    %54 = vector.shape_cast %51 : vector<8x288xf32> to vector<1x8x288xf32>
    tpu.vector_store %arg4[%c0_32, %c0_33, %c0_34], %54 {strides = array<i32>} : memref<1x8x288xf32, #tpu.memory_space<vmem>>, vector<1x8x288xf32>,
    return
  }
  func.func @transform_0(%arg0: i32) -> (i32, i32, i32) {
    %c0_i32 = arith.constant 0 : i32
    %c0_i32_0 = arith.constant 0 : i32
    %c0_i32_1 = arith.constant 0 : i32
    return %arg0, %c0_i32, %c0_i32_0 : i32, i32, i32
  }
  func.func @transform_1(%arg0: i32) -> (i32, i32, i32) {
    %c0_i32 = arith.constant 0 : i32
    %c0_i32_0 = arith.constant 0 : i32
    %c0_i32_1 = arith.constant 0 : i32
    %c0_i32_2 = arith.constant 0 : i32
    return %c0_i32, %c0_i32_0, %c0_i32_1 : i32, i32, i32
  }
  func.func @transform_2(%arg0: i32) -> (i32, i32) {
    %c0_i32 = arith.constant 0 : i32
    %c0_i32_0 = arith.constant 0 : i32
    %c0_i32_1 = arith.constant 0 : i32
    return %c0_i32, %c0_i32_0 : i32, i32
  }
  func.func @transform_3(%arg0: i32) -> (i32, i32, i32) {
    %c0_i32 = arith.constant 0 : i32
    %c0_i32_0 = arith.constant 0 : i32
    %c0_i32_1 = arith.constant 0 : i32
    return %arg0, %c0_i32, %c0_i32_0 : i32, i32, i32
  }
}

</mosaic_0001>

<llo_original>
// kernel: conv2d_tanh2.1
$region0: #{conv2d_tanh2.1}
  #allocation0 [shape = 'u32[]', space=smem, size = 0x4, offset = 0x4, fixed_abs, tag = 'smem constant byte address 0x4 - core index']
  #allocation1 [shape = 'u32[72,128]{1,0:T(1,128)}', space=vmem, size = 0x9000, scoped, tag = 'internal scratch']
  %s0 = inlined_call_operand.vmem [shape: bf16[2,4,384], index: 0, kind: input, shape index: {}]
  %s1 = inlined_call_operand.vmem [shape: bf16[9,8,4], index: 1, kind: input, shape index: {}]
  %s2 = inlined_call_operand.vmem [shape: f32[8,1], index: 2, kind: input, shape index: {}]
  %s3 = inlined_call_operand.vmem [shape: f32[2,8,288], index: 3, kind: output, shape index: {}]
  %s4 = sld [smem:[#allocation0]]
  $region45: #{conv2d_tanh2.1} parent=0
    _
  %s6 = ssub.s32 1, %s4
  %s7 = scalar_select 0, %s6, %s4
  loop: start=0, step=1, limit=4
  $region2: #{conv2d_tanh2.1} parent=0 // loop_pre_header
    _
  $region3: #{conv2d_tanh2.1} parent=0 // loop_header
    %s9 = sphi 0, %s13
    %p10 = scmp.ge.s32.totalorder %s9, 4
    %s19 = sphi 0, %s21
    %s22 = sphi 0, %s19
    %s23 = sphi 0, %s22
    %s39 = sphi 0, %s23
    %s43 = sphi 0, %s43
    %s45 = sphi 0, %s43
    %s46 = sphi 0, %s45
    %s60 = sphi 0, %s46
    %s64 = sphi 0, %s64
    %s66 = sphi 0, %s64
    %s67 = sphi 0, %s66
    %s81 = sphi 0, %s67
    %s87 = sphi 0, %s89
    %s90 = sphi 0, %s87
    %s91 = sphi 0, %s90
    %s107 = sphi 0, %s91
  $region4: #{conv2d_tanh2.1} parent=0 // loop_header_branch
    %12 = sbr.rel (%p10) target = $region8
  $region5: #{conv2d_tanh2.1} parent=0 // loop_body
    %s14 = ssub.s32 %s9, 1
    %s15 = ssub.s32 %s9, 2
    %s16 = sadd.s32 %s9, 1
    %s17 = ssub.s32 %s9, %s16
    %p18 = scmp.eq.s32.totalorder %s17, 0
    %s20 = sadd.s32 %s19, 1
    %s21 = scalar_select %p18, %s19, %s20
    %p24 = pneg %p18
    %p25 = scmp.eq.s32.totalorder %s9, 1
    %p26 = por %p24, %p25
    %p27 = scmp.ne.s32.totalorder %s19, %s22
    %p28 = scmp.eq.s32.totalorder %s9, 0
    %p29 = por %p27, %p28
    %p30 = scmp.ne.s32.totalorder %s19, %s22
    %p31 = scmp.eq.s32.totalorder %s14, 1
    %p32 = por %p30, %p31
    %p33 = scmp.ne.s32.totalorder %s22, %s23
    %p34 = scmp.eq.s32.totalorder %s14, 0
    %p35 = por %p33, %p34
    %p36 = scmp.ne.s32.totalorder %s22, %s23
    %p37 = scmp.eq.s32.totalorder %s15, 1
    %p38 = por %p36, %p37
    %p40 = scmp.ne.s32.totalorder %s23, %s39
    %p41 = scmp.eq.s32.totalorder %s15, 0
    %p42 = por %p40, %p41
    %s44 = sadd.s32 %s43, 1
    %p47 = scmp.eq.s32.totalorder %s9, 1
    %p48 = scmp.ne.s32.totalorder %s43, %s45
    %p49 = scmp.eq.s32.totalorder %s9, 0
    %p50 = por %p48, %p49
    %p51 = scmp.ne.s32.totalorder %s43, %s45
    %p52 = scmp.eq.s32.totalorder %s14, 1
    %p53 = por %p51, %p52
    %p54 = scmp.ne.s32.totalorder %s45, %s46
    %p55 = scmp.eq.s32.totalorder %s14, 0
    %p56 = por %p54, %p55
    %p57 = scmp.ne.s32.totalorder %s45, %s46
    %p58 = scmp.eq.s32.totalorder %s15, 1
    %p59 = por %p57, %p58
    %p61 = scmp.ne.s32.totalorder %s46, %s60
    %p62 = scmp.eq.s32.totalorder %s15, 0
    %p63 = por %p61, %p62
    %s65 = sadd.s32 %s64, 1
    %p68 = scmp.eq.s32.totalorder %s9, 1
    %p69 = scmp.ne.s32.totalorder %s64, %s66
    %p70 = scmp.eq.s32.totalorder %s9, 0
    %p71 = por %p69, %p70
    %p72 = scmp.ne.s32.totalorder %s64, %s66
    %p73 = scmp.eq.s32.totalorder %s14, 1
    %p74 = por %p72, %p73
    %p75 = scmp.ne.s32.totalorder %s66, %s67
    %p76 = scmp.eq.s32.totalorder %s14, 0
    %p77 = por %p75, %p76
    %p78 = scmp.ne.s32.totalorder %s66, %s67
    %p79 = scmp.eq.s32.totalorder %s15, 1
    %p80 = por %p78, %p79
    %p82 = scmp.ne.s32.totalorder %s67, %s81
    %p83 = scmp.eq.s32.totalorder %s15, 0
    %p84 = por %p82, %p83
    %s85 = ssub.s32 %s9, %s16
    %p86 = scmp.eq.s32.totalorder %s85, 0
    %s88 = sadd.s32 %s87, 1
    %s89 = scalar_select %p86, %s87, %s88
    %p92 = pneg %p86
    %p93 = scmp.eq.s32.totalorder %s9, 1
    %p94 = por %p92, %p93
    %p95 = scmp.ne.s32.totalorder %s87, %s90
    %p96 = scmp.eq.s32.totalorder %s9, 0
    %p97 = por %p95, %p96
    %p98 = scmp.ne.s32.totalorder %s87, %s90
    %p99 = scmp.eq.s32.totalorder %s14, 1
    %p100 = por %p98, %p99
    %p101 = scmp.ne.s32.totalorder %s90, %s91
    %p102 = scmp.eq.s32.totalorder %s14, 0
    %p103 = por %p101, %p102
    %p104 = scmp.ne.s32.totalorder %s90, %s91
    %p105 = scmp.eq.s32.totalorder %s15, 1
    %p106 = por %p104, %p105
    %p108 = scmp.ne.s32.totalorder %s91, %s107
    %p109 = scmp.eq.s32.totalorder %s15, 0
    %p110 = por %p108, %p109
    %p111 = scmp.le.s32.totalorder 1, %s9
    %p112 = scmp.lt.s32.totalorder %s9, 3
    %p113 = pnand %p111, %p112
    %p114 = pneg %p113
    // Predicated region
    $region9: #{conv2d_tanh2.1} parent=5 // pred_check
      _
    $region10: #{conv2d_tanh2.1} parent=5 // pred_check_branch
      %116 = sbr.rel (%p113) target = $region12
    $region11: #{conv2d_tanh2.1} parent=5 // pred_region
      %s117 = ssub.s32 %s9, 1
      // Predicated region
      $region13: #{conv2d_tanh2.1} parent=11 // pred_check
        %p118 = pneg %p56
      $region14: #{conv2d_tanh2.1} parent=11 // pred_check_branch
        %120 = sbr.rel (%p118) target = $region16
      $region15: #{conv2d_tanh2.1} parent=11 // pred_region
        _
      $region16: #{conv2d_tanh2.1} parent=11 // pred_fallthru
        _
      // Predicated region
      $region17: #{conv2d_tanh2.1} parent=11 // pred_check
        %p121 = pneg %p77
      $region18: #{conv2d_tanh2.1} parent=11 // pred_check_branch
        %123 = sbr.rel (%p121) target = $region20
      $region19: #{conv2d_tanh2.1} parent=11 // pred_region
        _
      $region20: #{conv2d_tanh2.1} parent=11 // pred_fallthru
        _
    $region12: #{conv2d_tanh2.1} parent=5 // pred_fallthru
      _
    %p124 = scmp.lt.s32.totalorder %s9, 2
    // Predicated region
    $region21: #{conv2d_tanh2.1} parent=5 // pred_check
      %p125 = pneg %p124
    $region22: #{conv2d_tanh2.1} parent=5 // pred_check_branch
      %127 = sbr.rel (%p125) target = $region24
    $region23: #{conv2d_tanh2.1} parent=5 // pred_region
      // Predicated region
      $region25: #{conv2d_tanh2.1} parent=23 // pred_check
        %p128 = pneg %p29
      $region26: #{conv2d_tanh2.1} parent=23 // pred_check_branch
        %130 = sbr.rel (%p128) target = $region28
      $region27: #{conv2d_tanh2.1} parent=23 // pred_region
        %p131 = scmp.lt.s32.totalorder %s9, 1
        %s132 = scalar_select %p131, %s9, 1
        %s133 = smul.addr %s132, 3
        %s134 = smul.addr %s133, 2
        %s135 = scalar_lea.vmem %s0, %s134
      $region28: #{conv2d_tanh2.1} parent=23 // pred_fallthru
        _
    $region24: #{conv2d_tanh2.1} parent=5 // pred_fallthru
      _
    %p136 = scmp.le.s32.totalorder 1, %s9
    %p137 = scmp.lt.s32.totalorder %s9, 3
    %p138 = pnand %p136, %p137
    %p139 = pneg %p138
    // Predicated region
    $region29: #{conv2d_tanh2.1} parent=5 // pred_check
      _
    $region30: #{conv2d_tanh2.1} parent=5 // pred_check_branch
      %141 = sbr.rel (%p138) target = $region32
    $region31: #{conv2d_tanh2.1} parent=5 // pred_region
      %s142 = ssub.s32 %s9, 1
      %p143 = scmp.lt.s32.totalorder %s14, 1
      %s144 = scalar_select %p143, %s14, 1
      %s145 = smul.addr %s144, 3
      %s146 = smul.addr %s145, 2
      %s147 = scalar_lea.vmem %s0, %s146
      %p148 = pneg %p35
      %p149 = pneg %p32
      %p150 = pneg %p56
      %p151 = pneg %p53
      %p152 = pneg %p77
      %p153 = pneg %p74
      %p154 = pneg %p103
      %p155 = pneg %p100
      %p156 = scmp.lt.s32.totalorder %s14, 1
      %s157 = scalar_select %p156, %s14, 1
      %s158 = smul.addr %s157, 3
      %s159 = smul.addr %s158, 8
      %s160 = scalar_lea.vmem %s3, %s159
      %p161 = scmp.lt.s32.totalorder %s14, 1
      %s162 = scalar_select %p161, %s14, 1
      %s163 = smul.addr %s162, 3
      %s164 = smul.addr %s163, 2
      %s165 = scalar_lea.vmem %s0, %s164
      %p166 = scmp.lt.s32.totalorder %s14, 1
      %s167 = scalar_select %p166, %s14, 1
      %s168 = smul.addr %s167, 3
      %s169 = smul.addr %s168, 8
      %s170 = scalar_lea.vmem %s3, %s169
      %v172 = vld [vmem:[%s165] sm:$0x3f]
      %v173 = vld [vmem:[%s1] sm:$0xf]
      %s174 = scalar_lea.vmem %s1, 4
      %v175 = vld [vmem:[%s174] sm:$0xf]
      %177 = vst [vmem:[#allocation1] ss:$4 sm:$0xff] %v172
      %v178 = vld.sshfl [vmem:[#allocation1] sm:$0xff pattern:$0x73625140]
      %v180 = vld.sshfl [vmem:[#allocation1 + $0x8] sm:$0xff pattern:$0x73625140]
      %v182 = vld.sshfl [vmem:[#allocation1 + $0x10] sm:$0xff pattern:$0x73625140]
      %184 = vrot.lane.b32.xlu0 %v178, 127
      %v185 = vpop.permute.xlu0 %184
      %186 = vrot.lane.b32.xlu0 %v180, 127
      %v187 = vpop.permute.xlu0 %186
      %188 = vrot.lane.b32.xlu0 %v182, 127
      %v189 = vpop.permute.xlu0 %188
      %vm190 = vcmask 1039360
      %v191 = vsel %vm190, %v185, %v187
      %v192 = vsel %vm190, %v187, %v189
      %vm193 = vcmask 31744
      %v195 = vsel %vm193, %v175, 0
      %vm197 = vcmask 1041408
      %v199 = vsel %vm197, %v191, 0
      %v202 = vsel %vm197, %v192, 0
      %v205 = vsel %vm197, %v189, 0
      %207 = vmatpush.bf16.msra.mxu0 0
      %208 = vmatpush.bf16.msra.mxu0 0
      %209 = vmatpush.bf16.msra.mxu0 0
      %210 = vmatpush.bf16.msra.mxu0 0
      %211 = vmatpush.bf16.msra.mxu0 0
      %212 = vmatpush.bf16.msra.mxu0 0
      %213 = vmatpush.bf16.msra.mxu0 0
      %214 = vmatpush.bf16.msra.mxu0 %v199
      %215 = vmatmul.bf16.gmra.mxu0 %v195
      %v216 = vpop.f32.mrf.mxu0
      %v217 = vadd.f32 0.0, %v216
      %v218 = vpop.f32.mrf.mxu0
      %219 = vdwg.mxu0
      %220 = vmatpush.bf16.msra.mxu0 0
      %221 = vmatpush.bf16.msra.mxu0 0
      %222 = vmatpush.bf16.msra.mxu0 0
      %223 = vmatpush.bf16.msra.mxu0 0
      %224 = vmatpush.bf16.msra.mxu0 0
      %225 = vmatpush.bf16.msra.mxu0 0
      %226 = vmatpush.bf16.msra.mxu0 0
      %227 = vmatpush.bf16.msra.mxu0 %v202
      %228 = vmatmul.bf16.gmra.mxu0 %v195
      %v229 = vpop.f32.mrf.mxu0
      %v230 = vadd.f32 0.0, %v229
      %v231 = vpop.f32.mrf.mxu0
      %232 = vdwg.mxu0
      %233 = vmatpush.bf16.msra.mxu0 0
      %234 = vmatpush.bf16.msra.mxu0 0
      %235 = vmatpush.bf16.msra.mxu0 0
      %236 = vmatpush.bf16.msra.mxu0 0
      %237 = vmatpush.bf16.msra.mxu0 0
      %238 = vmatpush.bf16.msra.mxu0 0
      %239 = vmatpush.bf16.msra.mxu0 0
      %240 = vmatpush.bf16.msra.mxu0 %v205
      %241 = vmatmul.bf16.gmra.mxu0 %v195
      %v242 = vpop.f32.mrf.mxu0
      %v243 = vadd.f32 0.0, %v242
      %v244 = vpop.f32.mrf.mxu0
      %245 = vdwg.mxu0
      %246 = vst [vmem:[#allocation1] ss:$4 sm:$0xff] %v172
      %v247 = vld.sshfl [vmem:[#allocation1] sm:$0xff pattern:$0x73625140]
      %v248 = vld.sshfl [vmem:[#allocation1 + $0x8] sm:$0xff pattern:$0x73625140]
      %v249 = vld.sshfl [vmem:[#allocation1 + $0x10] sm:$0xff pattern:$0x73625140]
      %v251 = vsel %vm193, %v173, 0
      %v253 = vsel %vm197, %v247, 0
      %v255 = vsel %vm197, %v248, 0
      %v257 = vsel %vm197, %v249, 0
      %259 = vmatpush.bf16.msra.mxu0 0
      %260 = vmatpush.bf16.msra.mxu0 0
      %261 = vmatpush.bf16.msra.mxu0 0
      %262 = vmatpush.bf16.msra.mxu0 0
      %263 = vmatpush.bf16.msra.mxu0 0
      %264 = vmatpush.bf16.msra.mxu0 0
      %265 = vmatpush.bf16.msra.mxu0 0
      %266 = vmatpush.bf16.msra.mxu0 %v253
      %267 = vmatmul.bf16.gmra.mxu0 %v251
      %v268 = vpop.f32.mrf.mxu0
      %v269 = vadd.f32 %v217, %v268
      %v270 = vpop.f32.mrf.mxu0
      %271 = vdwg.mxu0
      %272 = vmatpush.bf16.msra.mxu0 0
      %273 = vmatpush.bf16.msra.mxu0 0
      %274 = vmatpush.bf16.msra.mxu0 0
      %275 = vmatpush.bf16.msra.mxu0 0
      %276 = vmatpush.bf16.msra.mxu0 0
      %277 = vmatpush.bf16.msra.mxu0 0
      %278 = vmatpush.bf16.msra.mxu0 0
      %279 = vmatpush.bf16.msra.mxu0 %v255
      %280 = vmatmul.bf16.gmra.mxu0 %v251
      %v281 = vpop.f32.mrf.mxu0
      %v282 = vadd.f32 %v230, %v281
      %v283 = vpop.f32.mrf.mxu0
      %284 = vdwg.mxu0
      %285 = vmatpush.bf16.msra.mxu0 0
      %286 = vmatpush.bf16.msra.mxu0 0
      %287 = vmatpush.bf16.msra.mxu0 0
      %288 = vmatpush.bf16.msra.mxu0 0
      %289 = vmatpush.bf16.msra.mxu0 0
      %290 = vmatpush.bf16.msra.mxu0 0
      %291 = vmatpush.bf16.msra.mxu0 0
      %292 = vmatpush.bf16.msra.mxu0 %v257
      %293 = vmatmul.bf16.gmra.mxu0 %v251
      %v294 = vpop.f32.mrf.mxu0
      %v295 = vadd.f32 %v243, %v294
      %v296 = vpop.f32.mrf.mxu0
      %297 = vdwg.mxu0
      %s298 = scalar_lea.vmem %s1, 8
      %v299 = vld [vmem:[%s298] sm:$0xf]
      %300 = vst [vmem:[#allocation1] ss:$4 sm:$0xff] %v172
      %v301 = vld.sshfl [vmem:[#allocation1] sm:$0xff pattern:$0x73625140]
      %v303 = vld.sshfl [vmem:[#allocation1 + $0x8] sm:$0xff pattern:$0x73625140]
      %v305 = vld.sshfl [vmem:[#allocation1 + $0x10] sm:$0xff pattern:$0x73625140]
      %307 = vrot.lane.b32.xlu0 %v301, 126
      %v308 = vpop.permute.xlu0 %307
      %309 = vrot.lane.b32.xlu0 %v303, 126
      %v310 = vpop.permute.xlu0 %309
      %311 = vrot.lane.b32.xlu0 %v305, 126
      %v312 = vpop.permute.xlu0 %311
      %vm313 = vcmask 1031168
      %v314 = vsel %vm313, %v308, %v310
      %v315 = vsel %vm313, %v310, %v312
      %v317 = vsel %vm193, %v299, 0
      %v320 = vsel %vm197, %v314, 0
      %v323 = vsel %vm197, %v315, 0
      %v326 = vsel %vm197, %v312, 0
      %328 = vmatpush.bf16.msra.mxu0 0
      %329 = vmatpush.bf16.msra.mxu0 0
      %330 = vmatpush.bf16.msra.mxu0 0
      %331 = vmatpush.bf16.msra.mxu0 0
      %332 = vmatpush.bf16.msra.mxu0 0
      %333 = vmatpush.bf16.msra.mxu0 0
      %334 = vmatpush.bf16.msra.mxu0 0
      %335 = vmatpush.bf16.msra.mxu0 %v320
      %336 = vmatmul.bf16.gmra.mxu0 %v317
      %v337 = vpop.f32.mrf.mxu0
      %v338 = vadd.f32 0.0, %v337
      %v339 = vpop.f32.mrf.mxu0
      %340 = vdwg.mxu0
      %341 = vmatpush.bf16.msra.mxu0 0
      %342 = vmatpush.bf16.msra.mxu0 0
      %343 = vmatpush.bf16.msra.mxu0 0
      %344 = vmatpush.bf16.msra.mxu0 0
      %345 = vmatpush.bf16.msra.mxu0 0
      %346 = vmatpush.bf16.msra.mxu0 0
      %347 = vmatpush.bf16.msra.mxu0 0
      %348 = vmatpush.bf16.msra.mxu0 %v323
      %349 = vmatmul.bf16.gmra.mxu0 %v317
      %v350 = vpop.f32.mrf.mxu0
      %v351 = vadd.f32 0.0, %v350
      %v352 = vpop.f32.mrf.mxu0
      %353 = vdwg.mxu0
      %354 = vmatpush.bf16.msra.mxu0 0
      %355 = vmatpush.bf16.msra.mxu0 0
      %356 = vmatpush.bf16.msra.mxu0 0
      %357 = vmatpush.bf16.msra.mxu0 0
      %358 = vmatpush.bf16.msra.mxu0 0
      %359 = vmatpush.bf16.msra.mxu0 0
      %360 = vmatpush.bf16.msra.mxu0 0
      %361 = vmatpush.bf16.msra.mxu0 %v326
      %362 = vmatmul.bf16.gmra.mxu0 %v317
      %v363 = vpop.f32.mrf.mxu0
      %v364 = vadd.f32 0.0, %v363
      %v365 = vpop.f32.mrf.mxu0
      %366 = vdwg.mxu0
      %v367 = vadd.f32 %v269, %v338
      %v368 = vadd.f32 %v282, %v351
      %v369 = vadd.f32 %v295, %v364
      %s370 = scalar_lea.vmem %s1, 12
      %v371 = vld [vmem:[%s370] sm:$0xf]
      %372 = vst [vmem:[#allocation1] ss:$4 sm:$0xff] %v172
      %v373 = vld.sshfl [vmem:[#allocation1] sm:$0xff pattern:$0x73625140]
      %v375 = vld.sshfl [vmem:[#allocation1 + $0x8] sm:$0xff pattern:$0x73625140]
      %v377 = vld.sshfl [vmem:[#allocation1 + $0x10] sm:$0xff pattern:$0x73625140]
      %379 = vrot.lane.b32.xlu0 %v373, 110
      %v380 = vpop.permute.xlu0 %379
      %381 = vrot.lane.b32.xlu0 %v375, 110
      %v382 = vpop.permute.xlu0 %381
      %383 = vrot.lane.b32.xlu0 %v377, 110
      %v384 = vpop.permute.xlu0 %383
      %vm385 = vcmask 900096
      %v386 = vsel %vm385, %v380, %v382
      %v387 = vsel %vm385, %v382, %v384
      %v389 = vsel %vm193, %v371, 0
      %v392 = vsel %vm197, %v386, 0
      %v395 = vsel %vm197, %v387, 0
      %v398 = vsel %vm197, %v384, 0
      %400 = vmatpush.bf16.msra.mxu0 0
      %401 = vmatpush.bf16.msra.mxu0 0
      %402 = vmatpush.bf16.msra.mxu0 0
      %403 = vmatpush.bf16.msra.mxu0 0
      %404 = vmatpush.bf16.msra.mxu0 0
      %405 = vmatpush.bf16.msra.mxu0 0
      %406 = vmatpush.bf16.msra.mxu0 0
      %407 = vmatpush.bf16.msra.mxu0 %v392
      %408 = vmatmul.bf16.gmra.mxu0 %v389
      %v409 = vpop.f32.mrf.mxu0
      %v410 = vadd.f32 0.0, %v409
      %v411 = vpop.f32.mrf.mxu0
      %412 = vdwg.mxu0
      %413 = vmatpush.bf16.msra.mxu0 0
      %414 = vmatpush.bf16.msra.mxu0 0
      %415 = vmatpush.bf16.msra.mxu0 0
      %416 = vmatpush.bf16.msra.mxu0 0
      %417 = vmatpush.bf16.msra.mxu0 0
      %418 = vmatpush.bf16.msra.mxu0 0
      %419 = vmatpush.bf16.msra.mxu0 0
      %420 = vmatpush.bf16.msra.mxu0 %v395
      %421 = vmatmul.bf16.gmra.mxu0 %v389
      %v422 = vpop.f32.mrf.mxu0
      %v423 = vadd.f32 0.0, %v422
      %v424 = vpop.f32.mrf.mxu0
      %425 = vdwg.mxu0
      %426 = vmatpush.bf16.msra.mxu0 0
      %427 = vmatpush.bf16.msra.mxu0 0
      %428 = vmatpush.bf16.msra.mxu0 0
      %429 = vmatpush.bf16.msra.mxu0 0
      %430 = vmatpush.bf16.msra.mxu0 0
      %431 = vmatpush.bf16.msra.mxu0 0
      %432 = vmatpush.bf16.msra.mxu0 0
      %433 = vmatpush.bf16.msra.mxu0 %v398
      %434 = vmatmul.bf16.gmra.mxu0 %v389
      %v435 = vpop.f32.mrf.mxu0
      %v436 = vadd.f32 0.0, %v435
      %v437 = vpop.f32.mrf.mxu0
      %438 = vdwg.mxu0
      %v439 = vadd.f32 %v367, %v410
      %v440 = vadd.f32 %v368, %v423
      %v441 = vadd.f32 %v369, %v436
      %s442 = scalar_lea.vmem %s1, 16
      %v443 = vld [vmem:[%s442] sm:$0xf]
      %444 = vst [vmem:[#allocation1] ss:$4 sm:$0xff] %v172
      %v445 = vld.sshfl [vmem:[#allocation1] sm:$0xff pattern:$0x73625140]
      %v447 = vld.sshfl [vmem:[#allocation1 + $0x8] sm:$0xff pattern:$0x73625140]
      %v449 = vld.sshfl [vmem:[#allocation1 + $0x10] sm:$0xff pattern:$0x73625140]
      %451 = vrot.lane.b32.xlu0 %v445, 109
      %v452 = vpop.permute.xlu0 %451
      %453 = vrot.lane.b32.xlu0 %v447, 109
      %v454 = vpop.permute.xlu0 %453
      %455 = vrot.lane.b32.xlu0 %v449, 109
      %v456 = vpop.permute.xlu0 %455
      %vm457 = vcmask 891904
      %v458 = vsel %vm457, %v452, %v454
      %v459 = vsel %vm457, %v454, %v456
      %v461 = vsel %vm193, %v443, 0
      %v464 = vsel %vm197, %v458, 0
      %v467 = vsel %vm197, %v459, 0
      %v470 = vsel %vm197, %v456, 0
      %472 = vmatpush.bf16.msra.mxu0 0
      %473 = vmatpush.bf16.msra.mxu0 0
      %474 = vmatpush.bf16.msra.mxu0 0
      %475 = vmatpush.bf16.msra.mxu0 0
      %476 = vmatpush.bf16.msra.mxu0 0
      %477 = vmatpush.bf16.msra.mxu0 0
      %478 = vmatpush.bf16.msra.mxu0 0
      %479 = vmatpush.bf16.msra.mxu0 %v464
      %480 = vmatmul.bf16.gmra.mxu0 %v461
      %v481 = vpop.f32.mrf.mxu0
      %v482 = vadd.f32 0.0, %v481
      %v483 = vpop.f32.mrf.mxu0
      %484 = vdwg.mxu0
      %485 = vmatpush.bf16.msra.mxu0 0
      %486 = vmatpush.bf16.msra.mxu0 0
      %487 = vmatpush.bf16.msra.mxu0 0
      %488 = vmatpush.bf16.msra.mxu0 0
      %489 = vmatpush.bf16.msra.mxu0 0
      %490 = vmatpush.bf16.msra.mxu0 0
      %491 = vmatpush.bf16.msra.mxu0 0
      %492 = vmatpush.bf16.msra.mxu0 %v467
      %493 = vmatmul.bf16.gmra.mxu0 %v461
      %v494 = vpop.f32.mrf.mxu0
      %v495 = vadd.f32 0.0, %v494
      %v496 = vpop.f32.mrf.mxu0
      %497 = vdwg.mxu0
      %498 = vmatpush.bf16.msra.mxu0 0
      %499 = vmatpush.bf16.msra.mxu0 0
      %500 = vmatpush.bf16.msra.mxu0 0
      %501 = vmatpush.bf16.msra.mxu0 0
      %502 = vmatpush.bf16.msra.mxu0 0
      %503 = vmatpush.bf16.msra.mxu0 0
      %504 = vmatpush.bf16.msra.mxu0 0
      %505 = vmatpush.bf16.msra.mxu0 %v470
      %506 = vmatmul.bf16.gmra.mxu0 %v461
      %v507 = vpop.f32.mrf.mxu0
      %v508 = vadd.f32 0.0, %v507
      %v509 = vpop.f32.mrf.mxu0
      %510 = vdwg.mxu0
      %v511 = vadd.f32 %v439, %v482
      %v512 = vadd.f32 %v440, %v495
      %v513 = vadd.f32 %v441, %v508
      %s514 = scalar_lea.vmem %s1, 20
      %v515 = vld [vmem:[%s514] sm:$0xf]
      %516 = vst [vmem:[#allocation1] ss:$4 sm:$0xff] %v172
      %v517 = vld.sshfl [vmem:[#allocation1] sm:$0xff pattern:$0x73625140]
      %v519 = vld.sshfl [vmem:[#allocation1 + $0x8] sm:$0xff pattern:$0x73625140]
      %v521 = vld.sshfl [vmem:[#allocation1 + $0x10] sm:$0xff pattern:$0x73625140]
      %523 = vrot.lane.b32.xlu0 %v517, 108
      %v524 = vpop.permute.xlu0 %523
      %525 = vrot.lane.b32.xlu0 %v519, 108
      %v526 = vpop.permute.xlu0 %525
      %527 = vrot.lane.b32.xlu0 %v521, 108
      %v528 = vpop.permute.xlu0 %527
      %vm529 = vcmask 883712
      %v530 = vsel %vm529, %v524, %v526
      %v531 = vsel %vm529, %v526, %v528
      %v533 = vsel %vm193, %v515, 0
      %v536 = vsel %vm197, %v530, 0
      %v539 = vsel %vm197, %v531, 0
      %v542 = vsel %vm197, %v528, 0
      %544 = vmatpush.bf16.msra.mxu0 0
      %545 = vmatpush.bf16.msra.mxu0 0
      %546 = vmatpush.bf16.msra.mxu0 0
      %547 = vmatpush.bf16.msra.mxu0 0
      %548 = vmatpush.bf16.msra.mxu0 0
      %549 = vmatpush.bf16.msra.mxu0 0
      %550 = vmatpush.bf16.msra.mxu0 0
      %551 = vmatpush.bf16.msra.mxu0 %v536
      %552 = vmatmul.bf16.gmra.mxu0 %v533
      %v553 = vpop.f32.mrf.mxu0
      %v554 = vadd.f32 0.0, %v553
      %v555 = vpop.f32.mrf.mxu0
      %556 = vdwg.mxu0
      %557 = vmatpush.bf16.msra.mxu0 0
      %558 = vmatpush.bf16.msra.mxu0 0
      %559 = vmatpush.bf16.msra.mxu0 0
      %560 = vmatpush.bf16.msra.mxu0 0
      %561 = vmatpush.bf16.msra.mxu0 0
      %562 = vmatpush.bf16.msra.mxu0 0
      %563 = vmatpush.bf16.msra.mxu0 0
      %564 = vmatpush.bf16.msra.mxu0 %v539
      %565 = vmatmul.bf16.gmra.mxu0 %v533
      %v566 = vpop.f32.mrf.mxu0
      %v567 = vadd.f32 0.0, %v566
      %v568 = vpop.f32.mrf.mxu0
      %569 = vdwg.mxu0
      %570 = vmatpush.bf16.msra.mxu0 0
      %571 = vmatpush.bf16.msra.mxu0 0
      %572 = vmatpush.bf16.msra.mxu0 0
      %573 = vmatpush.bf16.msra.mxu0 0
      %574 = vmatpush.bf16.msra.mxu0 0
      %575 = vmatpush.bf16.msra.mxu0 0
      %576 = vmatpush.bf16.msra.mxu0 0
      %577 = vmatpush.bf16.msra.mxu0 %v542
      %578 = vmatmul.bf16.gmra.mxu0 %v533
      %v579 = vpop.f32.mrf.mxu0
      %v580 = vadd.f32 0.0, %v579
      %v581 = vpop.f32.mrf.mxu0
      %582 = vdwg.mxu0
      %v583 = vadd.f32 %v511, %v554
      %v584 = vadd.f32 %v512, %v567
      %v585 = vadd.f32 %v513, %v580
      %s586 = scalar_lea.vmem %s1, 24
      %v587 = vld [vmem:[%s586] sm:$0xf]
      %588 = vst [vmem:[#allocation1] ss:$4 sm:$0xff] %v172
      %v589 = vld.sshfl [vmem:[#allocation1] sm:$0xff pattern:$0x73625140]
      %v591 = vld.sshfl [vmem:[#allocation1 + $0x8] sm:$0xff pattern:$0x73625140]
      %v593 = vld.sshfl [vmem:[#allocation1 + $0x10] sm:$0xff pattern:$0x73625140]
      %595 = vrot.lane.b32.xlu0 %v589, 92
      %v596 = vpop.permute.xlu0 %595
      %597 = vrot.lane.b32.xlu0 %v591, 92
      %v598 = vpop.permute.xlu0 %597
      %599 = vrot.lane.b32.xlu0 %v593, 92
      %v600 = vpop.permute.xlu0 %599
      %vm601 = vcmask 752640
      %v602 = vsel %vm601, %v596, %v598
      %v603 = vsel %vm601, %v598, %v600
      %v605 = vsel %vm193, %v587, 0
      %v608 = vsel %vm197, %v602, 0
      %v611 = vsel %vm197, %v603, 0
      %v614 = vsel %vm197, %v600, 0
      %616 = vmatpush.bf16.msra.mxu0 0
      %617 = vmatpush.bf16.msra.mxu0 0
      %618 = vmatpush.bf16.msra.mxu0 0
      %619 = vmatpush.bf16.msra.mxu0 0
      %620 = vmatpush.bf16.msra.mxu0 0
      %621 = vmatpush.bf16.msra.mxu0 0
      %622 = vmatpush.bf16.msra.mxu0 0
      %623 = vmatpush.bf16.msra.mxu0 %v608
      %624 = vmatmul.bf16.gmra.mxu0 %v605
      %v625 = vpop.f32.mrf.mxu0
      %v626 = vadd.f32 0.0, %v625
      %v627 = vpop.f32.mrf.mxu0
      %628 = vdwg.mxu0
      %629 = vmatpush.bf16.msra.mxu0 0
      %630 = vmatpush.bf16.msra.mxu0 0
      %631 = vmatpush.bf16.msra.mxu0 0
      %632 = vmatpush.bf16.msra.mxu0 0
      %633 = vmatpush.bf16.msra.mxu0 0
      %634 = vmatpush.bf16.msra.mxu0 0
      %635 = vmatpush.bf16.msra.mxu0 0
      %636 = vmatpush.bf16.msra.mxu0 %v611
      %637 = vmatmul.bf16.gmra.mxu0 %v605
      %v638 = vpop.f32.mrf.mxu0
      %v639 = vadd.f32 0.0, %v638
      %v640 = vpop.f32.mrf.mxu0
      %641 = vdwg.mxu0
      %642 = vmatpush.bf16.msra.mxu0 0
      %643 = vmatpush.bf16.msra.mxu0 0
      %644 = vmatpush.bf16.msra.mxu0 0
      %645 = vmatpush.bf16.msra.mxu0 0
      %646 = vmatpush.bf16.msra.mxu0 0
      %647 = vmatpush.bf16.msra.mxu0 0
      %648 = vmatpush.bf16.msra.mxu0 0
      %649 = vmatpush.bf16.msra.mxu0 %v614
      %650 = vmatmul.bf16.gmra.mxu0 %v605
      %v651 = vpop.f32.mrf.mxu0
      %v652 = vadd.f32 0.0, %v651
      %v653 = vpop.f32.mrf.mxu0
      %654 = vdwg.mxu0
      %v655 = vadd.f32 %v583, %v626
      %v656 = vadd.f32 %v584, %v639
      %v657 = vadd.f32 %v585, %v652
      %s658 = scalar_lea.vmem %s1, 28
      %v659 = vld [vmem:[%s658] sm:$0xf]
      %660 = vst [vmem:[#allocation1] ss:$4 sm:$0xff] %v172
      %v661 = vld.sshfl [vmem:[#allocation1] sm:$0xff pattern:$0x73625140]
      %v663 = vld.sshfl [vmem:[#allocation1 + $0x8] sm:$0xff pattern:$0x73625140]
      %v665 = vld.sshfl [vmem:[#allocation1 + $0x10] sm:$0xff pattern:$0x73625140]
      %667 = vrot.lane.b32.xlu0 %v661, 91
      %v668 = vpop.permute.xlu0 %667
      %669 = vrot.lane.b32.xlu0 %v663, 91
      %v670 = vpop.permute.xlu0 %669
      %671 = vrot.lane.b32.xlu0 %v665, 91
      %v672 = vpop.permute.xlu0 %671
      %vm673 = vcmask 744448
      %v674 = vsel %vm673, %v668, %v670
      %v675 = vsel %vm673, %v670, %v672
      %v677 = vsel %vm193, %v659, 0
      %v680 = vsel %vm197, %v674, 0
      %v683 = vsel %vm197, %v675, 0
      %v686 = vsel %vm197, %v672, 0
      %688 = vmatpush.bf16.msra.mxu0 0
      %689 = vmatpush.bf16.msra.mxu0 0
      %690 = vmatpush.bf16.msra.mxu0 0
      %691 = vmatpush.bf16.msra.mxu0 0
      %692 = vmatpush.bf16.msra.mxu0 0
      %693 = vmatpush.bf16.msra.mxu0 0
      %694 = vmatpush.bf16.msra.mxu0 0
      %695 = vmatpush.bf16.msra.mxu0 %v680
      %696 = vmatmul.bf16.gmra.mxu0 %v677
      %v697 = vpop.f32.mrf.mxu0
      %v698 = vadd.f32 0.0, %v697
      %v699 = vpop.f32.mrf.mxu0
      %700 = vdwg.mxu0
      %701 = vmatpush.bf16.msra.mxu0 0
      %702 = vmatpush.bf16.msra.mxu0 0
      %703 = vmatpush.bf16.msra.mxu0 0
      %704 = vmatpush.bf16.msra.mxu0 0
      %705 = vmatpush.bf16.msra.mxu0 0
      %706 = vmatpush.bf16.msra.mxu0 0
      %707 = vmatpush.bf16.msra.mxu0 0
      %708 = vmatpush.bf16.msra.mxu0 %v683
      %709 = vmatmul.bf16.gmra.mxu0 %v677
      %v710 = vpop.f32.mrf.mxu0
      %v711 = vadd.f32 0.0, %v710
      %v712 = vpop.f32.mrf.mxu0
      %713 = vdwg.mxu0
      %714 = vmatpush.bf16.msra.mxu0 0
      %715 = vmatpush.bf16.msra.mxu0 0
      %716 = vmatpush.bf16.msra.mxu0 0
      %717 = vmatpush.bf16.msra.mxu0 0
      %718 = vmatpush.bf16.msra.mxu0 0
      %719 = vmatpush.bf16.msra.mxu0 0
      %720 = vmatpush.bf16.msra.mxu0 0
      %721 = vmatpush.bf16.msra.mxu0 %v686
      %722 = vmatmul.bf16.gmra.mxu0 %v677
      %v723 = vpop.f32.mrf.mxu0
      %v724 = vadd.f32 0.0, %v723
      %v725 = vpop.f32.mrf.mxu0
      %726 = vdwg.mxu0
      %v727 = vadd.f32 %v655, %v698
      %v728 = vadd.f32 %v656, %v711
      %v729 = vadd.f32 %v657, %v724
      %s730 = scalar_lea.vmem %s1, 32
      %v731 = vld [vmem:[%s730] sm:$0xf]
      %732 = vst [vmem:[#allocation1] ss:$4 sm:$0xff] %v172
      %v733 = vld.sshfl [vmem:[#allocation1] sm:$0xff pattern:$0x73625140]
      %v735 = vld.sshfl [vmem:[#allocation1 + $0x8] sm:$0xff pattern:$0x73625140]
      %v737 = vld.sshfl [vmem:[#allocation1 + $0x10] sm:$0xff pattern:$0x73625140]
      %739 = vrot.lane.b32.xlu0 %v733, 90
      %v740 = vpop.permute.xlu0 %739
      %741 = vrot.lane.b32.xlu0 %v735, 90
      %v742 = vpop.permute.xlu0 %741
      %743 = vrot.lane.b32.xlu0 %v737, 90
      %v744 = vpop.permute.xlu0 %743
      %vm745 = vcmask 736256
      %v746 = vsel %vm745, %v740, %v742
      %v747 = vsel %vm745, %v742, %v744
      %v749 = vsel %vm193, %v731, 0
      %v752 = vsel %vm197, %v746, 0
      %v755 = vsel %vm197, %v747, 0
      %v758 = vsel %vm197, %v744, 0
      %760 = vmatpush.bf16.msra.mxu0 0
      %761 = vmatpush.bf16.msra.mxu0 0
      %762 = vmatpush.bf16.msra.mxu0 0
      %763 = vmatpush.bf16.msra.mxu0 0
      %764 = vmatpush.bf16.msra.mxu0 0
      %765 = vmatpush.bf16.msra.mxu0 0
      %766 = vmatpush.bf16.msra.mxu0 0
      %767 = vmatpush.bf16.msra.mxu0 %v752
      %768 = vmatmul.bf16.gmra.mxu0 %v749
      %v769 = vpop.f32.mrf.mxu0
      %v770 = vadd.f32 0.0, %v769
      %v771 = vpop.f32.mrf.mxu0
      %772 = vdwg.mxu0
      %773 = vmatpush.bf16.msra.mxu0 0
      %774 = vmatpush.bf16.msra.mxu0 0
      %775 = vmatpush.bf16.msra.mxu0 0
      %776 = vmatpush.bf16.msra.mxu0 0
      %777 = vmatpush.bf16.msra.mxu0 0
      %778 = vmatpush.bf16.msra.mxu0 0
      %779 = vmatpush.bf16.msra.mxu0 0
      %780 = vmatpush.bf16.msra.mxu0 %v755
      %781 = vmatmul.bf16.gmra.mxu0 %v749
      %v782 = vpop.f32.mrf.mxu0
      %v783 = vadd.f32 0.0, %v782
      %v784 = vpop.f32.mrf.mxu0
      %785 = vdwg.mxu0
      %786 = vmatpush.bf16.msra.mxu0 0
      %787 = vmatpush.bf16.msra.mxu0 0
      %788 = vmatpush.bf16.msra.mxu0 0
      %789 = vmatpush.bf16.msra.mxu0 0
      %790 = vmatpush.bf16.msra.mxu0 0
      %791 = vmatpush.bf16.msra.mxu0 0
      %792 = vmatpush.bf16.msra.mxu0 0
      %793 = vmatpush.bf16.msra.mxu0 %v758
      %794 = vmatmul.bf16.gmra.mxu0 %v749
      %v795 = vpop.f32.mrf.mxu0
      %v796 = vadd.f32 0.0, %v795
      %v797 = vpop.f32.mrf.mxu0
      %798 = vdwg.mxu0
      %v799 = vadd.f32 %v727, %v770
      %v800 = vadd.f32 %v728, %v783
      %v801 = vadd.f32 %v729, %v796
      %v802 = vld [vmem:[%s2] sm:$0xff]
      %804 = vset.pattern.permute.xlu0 0
      %805 = vperm.xlu0 %804, %v802
      %v806 = vpop.permute.xlu0 %805
      %v808 = vadd.f32 %v799, %v806
      %v809 = vadd.f32 %v800, %v806
      %v810 = vadd.f32 %v801, %v806
      %v811 = vtanh.pop %v808
      %v812 = vtanh.pop %v809
      %v813 = vtanh.pop %v810
      %814 = vst [vmem:[%s170] sm:$0xff] %v811
      %815 = vst [vmem:[%s170 + $0x8] sm:$0xff] %v812
      %vm816 = vcmask 261120
      %817 = vst.msk [vmem:[%s170 + $0x10] sm:$0xff] %vm816, %v813
      %p818 = scmp.lt.s32.totalorder %s14, 1
      %s819 = scalar_select %p818, %s14, 1
      %s820 = smul.addr %s819, 3
      %s821 = smul.addr %s820, 8
      %s822 = scalar_lea.vmem %s3, %s821
      // Predicated region
      $region33: #{conv2d_tanh2.1} parent=31 // pred_check
        %p823 = pneg %p100
      $region34: #{conv2d_tanh2.1} parent=31 // pred_check_branch
        %825 = sbr.rel (%p823) target = $region36
      $region35: #{conv2d_tanh2.1} parent=31 // pred_region
        _
      $region36: #{conv2d_tanh2.1} parent=31 // pred_fallthru
        _
    $region32: #{conv2d_tanh2.1} parent=5 // pred_fallthru
      _
    %p826 = scmp.le.s32.totalorder 2, %s9
    // Predicated region
    $region37: #{conv2d_tanh2.1} parent=5 // pred_check
      %p827 = pneg %p826
    $region38: #{conv2d_tanh2.1} parent=5 // pred_check_branch
      %829 = sbr.rel (%p827) target = $region40
    $region39: #{conv2d_tanh2.1} parent=5 // pred_region
      %s830 = ssub.s32 %s9, 2
      // Predicated region
      $region41: #{conv2d_tanh2.1} parent=39 // pred_check
        %p831 = pneg %p106
      $region42: #{conv2d_tanh2.1} parent=39 // pred_check_branch
        %833 = sbr.rel (%p831) target = $region44
      $region43: #{conv2d_tanh2.1} parent=39 // pred_region
        %p834 = scmp.lt.s32.totalorder %s15, 1
        %s835 = scalar_select %p834, %s15, 1
        %s836 = smul.addr %s835, 3
        %s837 = smul.addr %s836, 8
        %s838 = scalar_lea.vmem %s3, %s837
      $region44: #{conv2d_tanh2.1} parent=39 // pred_fallthru
        _
    $region40: #{conv2d_tanh2.1} parent=5 // pred_fallthru
      _
  $region6: #{conv2d_tanh2.1} parent=0 // loop_footer
    %s13 = sadd.s32 1, %s9
  $region7: #{conv2d_tanh2.1} parent=0 // loop_footer_branch
    %8 = sbr.rel target = $region3
  $region8: #{conv2d_tanh2.1} parent=0 // loop_exit
    _

</llo_original>
